<compile_context>
chip_gen: v7x
topology: tpu7x:2x2x1
jax: 0.10.0
libtpu: 0.0.40
codegen_flags: <defaults>
</compile_context>

<pallas_src>
from typing import List, Sequence, Union

import jax
import jax.numpy as jnp
from jax.experimental import pallas as pl
from jax.experimental.pallas import tpu as pltpu

_SUBLANES = 8    # f32 vreg sublane count
_LANES = 128     # vreg lane count


def _uncertainty_weighting_kernel(losses_ref, log_vars_ref, out_ref):
    losses = losses_ref[...]          # (8, 128) f32, VMEM
    log_vars = log_vars_ref[...]      # (8, 128) f32, VMEM
    # exp(-log_vars) rides the EUP slot; the rest is a couple of VPU ops.
    weighted = jnp.exp(-log_vars) * losses + log_vars
    # Single vsel instead of bool->f32 cast + vmul.
    out_ref[...] = jnp.where(losses != 0.0, weighted, 0.0)


@jax.jit
def _uncertainty_weighting_padded(losses: jnp.ndarray, log_vars: jnp.ndarray):
    """losses, log_vars: (T,) f32 device arrays with T <= 128."""
    T = losses.shape[0]
    # Zero-pad into one lane-dense (8, 128) tile. Padded entries have
    # loss == 0 -> masked to 0 by the kernel, so padding is inert.
    losses_tile = jnp.zeros((_SUBLANES, _LANES), jnp.float32).at[0, :T].set(losses)
    log_vars_tile = jnp.zeros((_SUBLANES, _LANES), jnp.float32).at[0, :T].set(log_vars)

    out_tile = pl.pallas_call(
        _uncertainty_weighting_kernel,
        out_shape=jax.ShapeDtypeStruct((_SUBLANES, _LANES), jnp.float32),
        in_specs=[
            pl.BlockSpec(memory_space=pltpu.MemorySpace.VMEM),
            pl.BlockSpec(memory_space=pltpu.MemorySpace.VMEM),
        ],
        out_specs=pl.BlockSpec(memory_space=pltpu.MemorySpace.VMEM),
    )(losses_tile, log_vars_tile)

    return out_tile[0, :T]


def uncertainty_weighting(
    task_losses: Union[jnp.ndarray, Sequence], log_vars: jnp.ndarray
):
    """Forward pass of UncertaintyWeightingStrategy.

    task_losses: pre-stacked (T,) device array (preferred) or a list of
                 scalar losses (stacked here as a fallback).
    log_vars:    (T,) f32 parameter.

    Returns (weighted_task_losses of shape (T,), list(log_vars)).
    """
    if isinstance(task_losses, (list, tuple)):
        # Fallback path; prefer passing a pre-stacked (T,) array from the caller.
        losses = jnp.stack([jnp.asarray(l, dtype=jnp.float32) for l in task_losses])
    else:
        losses = jnp.asarray(task_losses, dtype=jnp.float32)

    log_vars = jnp.asarray(log_vars, dtype=jnp.float32)
    T = losses.shape[0]
    assert T <= _LANES, "uncertainty_weighting supports up to 128 tasks"

    weighted = _uncertainty_weighting_padded(losses, log_vars)

    # Single bulk device->host transfer (matches PyTorch .tolist()).
    log_vars_list: List[float] = jax.device_get(log_vars).tolist()
    return weighted, log_vars_list


if __name__ == "__main__":
    # Deterministic setup: 4 tasks, log_vars initialized to zeros (as in
    # __init__), then perturbed deterministically so exp(-log_var) is non-trivial.
    tasks = 4
    key = jax.random.PRNGKey(0)
    k_losses, k_lv = jax.random.split(key)

    # Task losses: positive scalars, with one forced to exactly 0 to exercise
    # the mask. Pre-stacked (T,) device array (no per-call Python stacking).
    task_losses = jax.random.uniform(
        k_losses, (tasks,), dtype=jnp.float32, minval=0.1, maxval=2.0
    )
    task_losses = task_losses.at[2].set(0.0)

    # Parameter: log_vars (nn.Parameter(torch.zeros(tasks))) + deterministic perturbation.
    log_vars = jnp.zeros((tasks,), dtype=jnp.float32)
    log_vars = log_vars + 0.1 * jax.random.normal(k_lv, (tasks,), dtype=jnp.float32)

    weighted, log_vars_list = uncertainty_weighting(task_losses, log_vars)
    weighted = jax.block_until_ready(weighted)

    # Reference check in plain JAX.
    mask = (task_losses != 0.0).astype(jnp.float32)
    ref = (jnp.exp(-log_vars) * task_losses + log_vars) * mask
    assert weighted.shape == (tasks,), weighted.shape
    assert jnp.allclose(weighted, ref, atol=1e-6), (weighted, ref)
    assert len(log_vars_list) == tasks

    print("KERNEL_OK")
</pallas_src>

<mosaic_0001>
module attributes {stable_mosaic.version = 11 : i64} {
  func.func @_uncertainty_weighting_kernel(%arg0: memref<8x128xf32, #tpu.memory_space<vmem>>, %arg1: memref<8x128xf32, #tpu.memory_space<vmem>>, %arg2: memref<8x128xf32, #tpu.memory_space<vmem>>) attributes {dimension_semantics = [], scalar_prefetch = 0 : i64, scratch_operands = 0 : i64, tpu.core_type = #tpu.core_type<tc>} {
    %c0 = arith.constant 0 : index
    %c0_0 = arith.constant 0 : index
    %0 = vector.load %arg0[%c0, %c0_0] : memref<8x128xf32, #tpu.memory_space<vmem>>, vector<8x128xf32>
    %c0_1 = arith.constant 0 : index
    %c0_2 = arith.constant 0 : index
    %1 = vector.load %arg1[%c0_1, %c0_2] : memref<8x128xf32, #tpu.memory_space<vmem>>, vector<8x128xf32>
    %cst = arith.constant 0.000000e+00 : f32
    %2 = vector.broadcast %cst : f32 to vector<8x128xf32>
    %3 = arith.subf %2, %1 : vector<8x128xf32>
    %4 = math.exp %3 : vector<8x128xf32>
    %5 = arith.mulf %4, %0 : vector<8x128xf32>
    %6 = arith.addf %5, %1 : vector<8x128xf32>
    %cst_3 = arith.constant 0.000000e+00 : f32
    %7 = vector.broadcast %cst_3 : f32 to vector<8x128xf32>
    %8 = arith.cmpf one, %0, %7 : vector<8x128xf32>
    %cst_4 = arith.constant 0.000000e+00 : f32
    %9 = vector.broadcast %cst_4 : f32 to vector<8x128xf32>
    %10 = arith.select %8, %6, %9 : vector<8x128xi1>, vector<8x128xf32>
    %c0_5 = arith.constant 0 : index
    %c0_6 = arith.constant 0 : index
    %11 = vector.load %arg2[%c0_5, %c0_6] : memref<8x128xf32, #tpu.memory_space<vmem>>, vector<8x128xf32>
    tpu.vector_store %arg2[%c0_5, %c0_6], %10 {strides = array<i32>} : memref<8x128xf32, #tpu.memory_space<vmem>>, vector<8x128xf32>,
    return
  }
}

</mosaic_0001>

<llo_original>
// kernel: _uncertainty_weighting_padded.1
$region0: #{_uncertainty_weighting_padded.1}
  #allocation0 [shape = 'u32[]', space=smem, size = 0x4, offset = 0x4, fixed_abs, tag = 'smem constant byte address 0x4 - core index']
  #allocation1 [shape = 'u32[144,128]{1,0:T(1,128)}', space=vmem, size = 0x12000, scoped, tag = 'internal scratch']
  %s0 = inlined_call_operand.vmem [shape: f32[8,128], index: 0, kind: input, shape index: {}]
  %s1 = inlined_call_operand.vmem [shape: f32[8,128], index: 1, kind: input, shape index: {}]
  %s2 = inlined_call_operand.vmem [shape: f32[8,128], index: 2, kind: output, shape index: {}]
  %s3 = sld [smem:[#allocation0]]
  $region18: #{_uncertainty_weighting_padded.1} parent=0
    _
  %s5 = ssub.s32 1, %s3
  %s6 = scalar_select 0, %s5, %s3
  // Predicated region
  $region2: #{_uncertainty_weighting_padded.1} parent=0 // pred_check
    _
  $region3: #{_uncertainty_weighting_padded.1} parent=0 // pred_check_branch
    %8 = sbr.rel (0) target = $region5
  $region4: #{_uncertainty_weighting_padded.1} parent=0 // pred_region
    _
  $region5: #{_uncertainty_weighting_padded.1} parent=0 // pred_fallthru
    _
  // Predicated region
  $region6: #{_uncertainty_weighting_padded.1} parent=0 // pred_check
    _
  $region7: #{_uncertainty_weighting_padded.1} parent=0 // pred_check_branch
    %10 = sbr.rel (0) target = $region9
  $region8: #{_uncertainty_weighting_padded.1} parent=0 // pred_region
    _
  $region9: #{_uncertainty_weighting_padded.1} parent=0 // pred_fallthru
    _
  %v11 = vld [vmem:[%s0] sm:$0xff]
  %v12 = vld [vmem:[%s1] sm:$0xff]
  %v13 = vsub.f32 0.0, %v12
  %v14 = vmul.f32 %v13, 1.442695
  %v15 = vpow.pop %v14
  %v16 = vmul.f32 %v15, %v11
  %v17 = vadd.f32 %v16, %v12
  %vm18 = vcmp.ne.f32.partialorder %v11, 0.0
  %v19 = vsel %vm18, %v17, 0.0
  %20 = vst [vmem:[%s2] sm:$0xff] %v19
  // Predicated region
  $region10: #{_uncertainty_weighting_padded.1} parent=0 // pred_check
    _
  $region11: #{_uncertainty_weighting_padded.1} parent=0 // pred_check_branch
    %22 = sbr.rel (0) target = $region13
  $region12: #{_uncertainty_weighting_padded.1} parent=0 // pred_region
    _
  $region13: #{_uncertainty_weighting_padded.1} parent=0 // pred_fallthru
    _
  // Predicated region
  $region14: #{_uncertainty_weighting_padded.1} parent=0 // pred_check
    _
  $region15: #{_uncertainty_weighting_padded.1} parent=0 // pred_check_branch
    %24 = sbr.rel (0) target = $region17
  $region16: #{_uncertainty_weighting_padded.1} parent=0 // pred_region
    _
  $region17: #{_uncertainty_weighting_padded.1} parent=0 // pred_fallthru
    _

</llo_original>
